<compile_context>
chip_gen: v5e
topology: v5e:2x2
jax: 0.10.0
libtpu: 0.0.40
codegen_flags: <defaults>
</compile_context>

<pallas_src>
import functools

import jax
import jax.numpy as jnp
from jax.experimental import pallas as pl
from jax.experimental.pallas import tpu as pltpu


def _fused_affine_kernel(x_ref, w_ref, b_ref, o_ref):
    # x_ref: [TB, D_in]   w_ref: [D_in, D_out]   b_ref: [1, D_out] (f32)
    # o_ref: [TB, D_out]  (f32)
    y = jnp.dot(x_ref[...], w_ref[...], preferred_element_type=jnp.float32)
    o_ref[...] = (y + b_ref[...].astype(jnp.float32)).astype(o_ref.dtype)


def prepare_fused_params(w1, b1, w2, b2, compute_dtype=jnp.float32):
    """One-time parameter fusion:  y = x @ (W1 @ W2) + (b1 @ W2 + b2).

    Valid because the reference feeds the pre-ReLU hidden activation into the
    second Linear.  Returns (w_fused [D_in, D_out] in compute_dtype,
    b_fused [1, D_out] in f32).
    """
    w1 = w1.astype(jnp.float32)
    w2 = w2.astype(jnp.float32)
    w_fused = jnp.dot(w1, w2, preferred_element_type=jnp.float32)           # [D_in, D_out]
    b_fused = (jnp.dot(b1.astype(jnp.float32).reshape(1, -1), w2,
                       preferred_element_type=jnp.float32)
               + b2.astype(jnp.float32).reshape(1, -1))                     # [1, D_out]
    return w_fused.astype(compute_dtype), b_fused


@functools.partial(jax.jit, static_argnames=("batch_tile",))
def single_hidden_forward(x, w_fused, b_fused, *, batch_tile=2048):
    """Forward pass of SingleHidden with pre-fused parameters.

    x       : [B, ...]          (flattened to [B, D_in], cast to w_fused.dtype)
    w_fused : [D_in, D_out]     (f32 or bf16)
    b_fused : [1, D_out]        (f32)
    Returns [B, D_out] float32.
    """
    B = x.shape[0]
    x2d = x.reshape(B, -1).astype(w_fused.dtype)        # x.view(x.shape[0], -1)
    D_in = x2d.shape[1]
    D_out = w_fused.shape[1]

    if B <= batch_tile:
        # Gridless single-shot call: whole arrays resident in VMEM, no
        # pipeline prologue/epilogue, direct (B, D_out) output (no slice).
        return pl.pallas_call(
            _fused_affine_kernel,
            out_shape=jax.ShapeDtypeStruct((B, D_out), jnp.float32),
            in_specs=[
                pl.BlockSpec(memory_space=pltpu.MemorySpace.VMEM),
                pl.BlockSpec(memory_space=pltpu.MemorySpace.VMEM),
                pl.BlockSpec(memory_space=pltpu.MemorySpace.VMEM),
            ],
            out_specs=pl.BlockSpec(memory_space=pltpu.MemorySpace.VMEM),
        )(x2d, w_fused, b_fused)

    # Large-batch path: stream x over a batch-tiled grid; the tiny fused
    # weights / bias stay resident in VMEM (constant index_map) across steps.
    TB = batch_tile
    # Keep >= 4 grid steps when the batch allows it, so the "parallel" batch
    # axis splits evenly across v7x's two TensorCores.
    while TB > 256 and pl.cdiv(B, TB) < 4:
        TB //= 2
    B_pad = pl.cdiv(B, TB) * TB
    if B_pad != B:
        x2d = jnp.pad(x2d, ((0, B_pad - B), (0, 0)))

    y_pad = pl.pallas_call(
        _fused_affine_kernel,
        out_shape=jax.ShapeDtypeStruct((B_pad, D_out), jnp.float32),
        grid=(B_pad // TB,),
        in_specs=[
            pl.BlockSpec((TB, D_in), lambda i: (i, 0)),        # streamed x tiles
            pl.BlockSpec((D_in, D_out), lambda i: (0, 0)),     # resident weights
            pl.BlockSpec((1, D_out), lambda i: (0, 0)),        # resident bias
        ],
        out_specs=pl.BlockSpec((TB, D_out), lambda i: (i, 0)),  # unpadded writeback
        compiler_params=pltpu.CompilerParams(
            dimension_semantics=("parallel",),                  # 2 TCs on v7x
        ),
    )(x2d, w_fused, b_fused)
    return y_pad[:B]


def init_params(key, D_in, H, D_out):
    """PyTorch-style Linear init: U(-1/sqrt(fan_in), 1/sqrt(fan_in)).
    Weights returned already transposed to [in, out]."""
    k1, k2, k3, k4 = jax.random.split(key, 4)
    bound1 = 1.0 / jnp.sqrt(D_in)
    bound2 = 1.0 / jnp.sqrt(H)
    w1 = jax.random.uniform(k1, (D_in, H), jnp.float32, -bound1, bound1)
    b1 = jax.random.uniform(k2, (H,), jnp.float32, -bound1, bound1)
    w2 = jax.random.uniform(k3, (H, D_out), jnp.float32, -bound2, bound2)
    b2 = jax.random.uniform(k4, (D_out,), jnp.float32, -bound2, bound2)
    return w1, b1, w2, b2


def _reference(x, w1, b1, w2, b2):
    # Faithful to the PyTorch module: the ReLU output is computed but unused.
    h = x.reshape(x.shape[0], -1) @ w1 + b1
    _hidden_relu = jnp.maximum(h, 0.0)   # dead, as in the spec
    return h @ w2 + b2


if __name__ == "__main__":
    # Titanic-style shapes: B=8 samples, D_in=8 features, H=32 hidden, D_out=2 classes.
    B, D_in, H, D_out = 8, 8, 32, 2

    key = jax.random.PRNGKey(0)
    kx, kp, kx2 = jax.random.split(key, 3)
    x = jax.random.normal(kx, (B, D_in), jnp.float32)
    w1, b1, w2, b2 = init_params(kp, D_in, H, D_out)

    # One-time parameter fusion (f32 and bf16 compute variants).
    wf32, bf32 = prepare_fused_params(w1, b1, w2, b2)
    wbf16, bbf16 = prepare_fused_params(w1, b1, w2, b2, compute_dtype=jnp.bfloat16)

    # Small-batch (gridless, whole-array-in-VMEM) path, f32.
    y = single_hidden_forward(x, wf32, bf32)
    jax.block_until_ready(y)
    y_ref = _reference(x, w1, b1, w2, b2)
    assert y.shape == (B, D_out)
    assert jnp.allclose(y, y_ref, atol=1e-5, rtol=1e-5)

    # Large-batch (batch-tiled, weights-resident) path, f32, non-multiple batch.
    B_big = 9000
    x_big = jax.random.normal(kx2, (B_big, D_in), jnp.float32)
    y_big = single_hidden_forward(x_big, wf32, bf32, batch_tile=2048)
    jax.block_until_ready(y_big)
    y_big_ref = _reference(x_big, w1, b1, w2, b2)
    assert y_big.shape == (B_big, D_out)
    assert jnp.allclose(y_big, y_big_ref, atol=1e-4, rtol=1e-5)

    # Large-batch path with bf16 inputs/weights (f32 accumulate) — looser tolerance.
    y_bf16 = single_hidden_forward(x_big, wbf16, bbf16, batch_tile=2048)
    jax.block_until_ready(y_bf16)
    assert y_bf16.shape == (B_big, D_out)
    assert jnp.allclose(y_bf16, y_big_ref, atol=5e-2, rtol=5e-2)

    print("KERNEL_OK")
</pallas_src>

<mosaic_0001>
module attributes {stable_mosaic.version = 11 : i64} {
  func.func @_fused_affine_kernel(%arg0: memref<8x8xf32, #tpu.memory_space<vmem>>, %arg1: memref<8x2xf32, #tpu.memory_space<vmem>>, %arg2: memref<1x2xf32, #tpu.memory_space<vmem>>, %arg3: memref<8x2xf32, #tpu.memory_space<vmem>>) attributes {dimension_semantics = [], scalar_prefetch = 0 : i64, scratch_operands = 0 : i64, tpu.core_type = #tpu.core_type<tc>} {
    %c0 = arith.constant 0 : index
    %c0_0 = arith.constant 0 : index
    %0 = vector.load %arg0[%c0, %c0_0] : memref<8x8xf32, #tpu.memory_space<vmem>>, vector<8x8xf32>
    %c0_1 = arith.constant 0 : index
    %c0_2 = arith.constant 0 : index
    %1 = vector.load %arg1[%c0_1, %c0_2] : memref<8x2xf32, #tpu.memory_space<vmem>>, vector<8x2xf32>
    %cst = arith.constant dense<0.000000e+00> : vector<8x2xf32>
    %2 = tpu.matmul %0, %1, %cst {dimension_numbers = #tpu.dot_dimension_numbers<[1], [0], [0], [1], [0, 0, 1, 1], [], []>} : vector<8x8xf32>, vector<8x2xf32>, vector<8x2xf32> -> vector<8x2xf32>
    %c0_3 = arith.constant 0 : index
    %c0_4 = arith.constant 0 : index
    %3 = vector.load %arg2[%c0_3, %c0_4] : memref<1x2xf32, #tpu.memory_space<vmem>>, vector<1x2xf32>
    %4 = vector.broadcast %3 : vector<1x2xf32> to vector<8x2xf32>
    %5 = arith.addf %2, %4 : vector<8x2xf32>
    %c0_5 = arith.constant 0 : index
    %c0_6 = arith.constant 0 : index
    %6 = vector.load %arg3[%c0_5, %c0_6] : memref<8x2xf32, #tpu.memory_space<vmem>>, vector<8x2xf32>
    tpu.vector_store %arg3[%c0_5, %c0_6], %5 {strides = array<i32>} : memref<8x2xf32, #tpu.memory_space<vmem>>, vector<8x2xf32>,
    return
  }
}

</mosaic_0001>

<llo_original>
// kernel: single_hidden_forward.1
$region0: #{single_hidden_forward.1}
  #allocation0 [shape = 'u32[]', space=smem, size = 0x4, offset = 0x4, fixed_abs, tag = 'smem constant byte address 0x4 - core index']
  #allocation1 [shape = 'u32[72,128]{1,0:T(1,128)}', space=vmem, size = 0x9000, scoped, tag = 'internal scratch']
  %s0 = inlined_call_operand.vmem [shape: f32[8,8], index: 0, kind: input, shape index: {}]
  %s1 = inlined_call_operand.vmem [shape: f32[8,2], index: 1, kind: input, shape index: {}]
  %s2 = inlined_call_operand.vmem [shape: f32[1,2], index: 2, kind: input, shape index: {}]
  %s3 = inlined_call_operand.vmem [shape: f32[8,2], index: 3, kind: output, shape index: {}]
  %s4 = sld [smem:[#allocation0]]
  $region22: #{single_hidden_forward.1} parent=0
    _
  %s6 = ssub.s32 1, %s4
  %s7 = scalar_select 0, %s6, %s4
  // Predicated region
  $region2: #{single_hidden_forward.1} parent=0 // pred_check
    _
  $region3: #{single_hidden_forward.1} parent=0 // pred_check_branch
    %9 = sbr.rel (0) target = $region5
  $region4: #{single_hidden_forward.1} parent=0 // pred_region
    _
  $region5: #{single_hidden_forward.1} parent=0 // pred_fallthru
    _
  // Predicated region
  $region6: #{single_hidden_forward.1} parent=0 // pred_check
    _
  $region7: #{single_hidden_forward.1} parent=0 // pred_check_branch
    %11 = sbr.rel (0) target = $region9
  $region8: #{single_hidden_forward.1} parent=0 // pred_region
    _
  $region9: #{single_hidden_forward.1} parent=0 // pred_fallthru
    _
  // Predicated region
  $region10: #{single_hidden_forward.1} parent=0 // pred_check
    _
  $region11: #{single_hidden_forward.1} parent=0 // pred_check_branch
    %13 = sbr.rel (0) target = $region13
  $region12: #{single_hidden_forward.1} parent=0 // pred_region
    _
  $region13: #{single_hidden_forward.1} parent=0 // pred_fallthru
    _
  %v14 = vld [vmem:[%s0] sm:$0xff]
  %v15 = vld [vmem:[%s1] sm:$0xff]
  %v16 = vld [vmem:[%s2] sm:$0x1]
  %v18 = vperm.slane %v16, 0
  %vm20 = vcmask 64512
  %v22 = vsel %vm20, %v14, 0
  %24 = vmatpush.msra.mxu0 0.0
  %25 = vmatpush.msra.mxu0 0.0
  %26 = vmatpush.msra.mxu0 0.0
  %27 = vmatpush.msra.mxu0 0.0
  %28 = vmatpush.msra.mxu0 0.0
  %29 = vmatpush.msra.mxu0 0.0
  %30 = vmatpush.msra.mxu0 0.0
  %31 = vmatpush.msra.mxu0 0.0
  %32 = vmatpush.msra.mxu0 0.0
  %33 = vmatpush.msra.mxu0 0.0
  %34 = vmatpush.msra.mxu0 0.0
  %35 = vmatpush.msra.mxu0 0.0
  %36 = vmatpush.msra.mxu0 0.0
  %37 = vmatpush.msra.mxu0 0.0
  %38 = vmatpush.msra.mxu0 0.0
  %39 = vmatpush.msra.mxu0 %v15
  %40 = vmatmul.f32.gmra.mxu0 %v22
  %v41 = vpop.f32.mrf.mxu0
  %v42 = vadd.f32 %v18, %v41
  %43 = vdwg.mxu0
  %vm44 = vcmask 15360
  %45 = vst.msk [vmem:[%s3] sm:$0xff] %vm44, %v42
  // Predicated region
  $region14: #{single_hidden_forward.1} parent=0 // pred_check
    _
  $region15: #{single_hidden_forward.1} parent=0 // pred_check_branch
    %47 = sbr.rel (0) target = $region17
  $region16: #{single_hidden_forward.1} parent=0 // pred_region
    _
  $region17: #{single_hidden_forward.1} parent=0 // pred_fallthru
    _
  // Predicated region
  $region18: #{single_hidden_forward.1} parent=0 // pred_check
    _
  $region19: #{single_hidden_forward.1} parent=0 // pred_check_branch
    %49 = sbr.rel (0) target = $region21
  $region20: #{single_hidden_forward.1} parent=0 // pred_region
    _
  $region21: #{single_hidden_forward.1} parent=0 // pred_fallthru
    _

</llo_original>
